<compile_context>
chip_gen: v6e
topology: v6e:2x2x1
jax: 0.10.0
libtpu: 0.0.40
codegen_flags: <defaults>
</compile_context>

<pallas_src>
import functools
import math

import jax
import jax.numpy as jnp
from jax.experimental import pallas as pl
from jax.experimental.pallas import tpu as pltpu


def _round_up(x, m):
    return ((x + m - 1) // m) * m


def _sublane_multiple(*dtypes):
    """Min second-minor multiple so every tile is a whole native TPU tile."""
    m = 8
    for dt in dtypes:
        bits = jnp.dtype(dt).itemsize * 8
        m = max(m, 256 // bits)          # 8 for 32-bit, 16 for bf16, 32 for int8
    return m


def _select_tiles(B, d_in, d_out, tm, tn, tk, sub):
    tm = min(tm, _round_up(B, sub))
    tn = min(tn, _round_up(d_out, 128))
    tk_eff = d_in if d_in <= tk else tk        # tk must be a multiple of 128 when tiled
    bp = _round_up(B, tm)
    np_ = _round_up(d_out, tn)
    kp = _round_up(d_in, tk_eff)
    return tm, tn, tk_eff, bp, np_, kp


# ---------------------------------------------------------------------------
# Kernels
# ---------------------------------------------------------------------------
def _dfa_fc_kernel_single_k(x_ref, w_ref, b_ref, y_ref, dy_ref):
    # Whole reduction fits one K tile: no scratch accumulator, no pl.when.
    # x_ref: (TM, K) bf16   w_ref: (K, TN) bf16   b_ref: (1, TN) f32
    z = jnp.dot(x_ref[...], w_ref[...], preferred_element_type=jnp.float32)
    z = z + b_ref[...]
    y_ref[...] = jnp.maximum(z, 0.0).astype(y_ref.dtype)
    dy_ref[...] = (z > 0.0).astype(dy_ref.dtype)


def _dfa_fc_kernel_multi_k(x_ref, w_ref, b_ref, y_ref, dy_ref, acc_ref):
    # K-tiled reduction with an f32 VMEM accumulator resident across the K axis.
    k = pl.program_id(2)

    @pl.when(k == 0)
    def _():
        # Fold the bias into the init (saves the finalize add).
        acc_ref[...] = jnp.broadcast_to(b_ref[...], acc_ref.shape)

    acc_ref[...] += jnp.dot(x_ref[...], w_ref[...],
                            preferred_element_type=jnp.float32)

    @pl.when(k == pl.num_programs(2) - 1)
    def _():
        z = acc_ref[...]
        y_ref[...] = jnp.maximum(z, 0.0).astype(y_ref.dtype)
        dy_ref[...] = (z > 0.0).astype(dy_ref.dtype)


# ---------------------------------------------------------------------------
# Wrapper
# ---------------------------------------------------------------------------
def prepare_dfa_fc_params(weight, bias, *, tn=512, tk=1024,
                          compute_dtype=jnp.bfloat16):
    """Pad / cast / transpose the static nn.Linear params once.

    In a training loop call this once per step (or once per weight update)
    and pass the result via `prepared_params=` so the O(d_out*d_in) pad/cast
    is hoisted out of the per-batch forward.
    """
    d_out, d_in = weight.shape
    _, _, _, _, np_, kp = _select_tiles(1, d_in, d_out, 8, tn, tk, 8)
    wT = weight.T.astype(compute_dtype)          # (d_in, d_out): plain A @ W
    if (kp, np_) != (d_in, d_out):
        wT = jnp.pad(wT, ((0, kp - d_in), (0, np_ - d_out)))
    b = bias.astype(jnp.float32)
    if np_ != d_out:
        b = jnp.pad(b, (0, np_ - d_out))
    return wT, b.reshape(1, np_)


def dfa_fully_connected_forward(x, weight, bias, *,
                                tm=512, tn=512, tk=1024,
                                compute_dtype=jnp.bfloat16,
                                grad_dtype=jnp.bfloat16,
                                out_dtype=None,
                                prepared_params=None):
    """Forward of DFAFullyConnected (relu activation, calc_grad=True).

    Args:
      x:      (B, input_dim)
      weight: (output_dim, input_dim)  (PyTorch nn.Linear layout)
      bias:   (output_dim,)

    Returns:
      (activation_output, activation_derivative_output), both (B, output_dim).
      activation_output is in x.dtype (unless out_dtype given); the derivative
      mask is stored in grad_dtype (bf16 by default) to halve HBM writeback.
    """
    B, d_in = x.shape
    d_out, d_in_w = weight.shape
    assert d_in == d_in_w
    out_dtype = x.dtype if out_dtype is None else out_dtype

    sub = _sublane_multiple(compute_dtype, out_dtype, grad_dtype)
    tm, tn, tk_eff, bp, np_, kp = _select_tiles(B, d_in, d_out, tm, tn, tk, sub)

    # Static params: cast/transpose/pad once (hoistable via prepared_params).
    if prepared_params is None:
        wT, b2 = prepare_dfa_fc_params(weight, bias, tn=tn, tk=tk,
                                       compute_dtype=compute_dtype)
    else:
        wT, b2 = prepared_params
    assert wT.shape == (kp, np_) and b2.shape == (1, np_)

    # Activation input: cast to the MXU operand dtype in the wrapper (halves
    # HBM->VMEM DMA bytes) and zero-pad to tile-aligned shape.  Zero K padding
    # (on both x and W) contributes nothing to the matmul.
    xq = x.astype(compute_dtype)
    if (bp, kp) != (B, d_in):
        xq = jnp.pad(xq, ((0, bp - B), (0, kp - d_in)))

    nk = kp // tk_eff
    grid = (bp // tm, np_ // tn, nk)

    in_specs = [
        pl.BlockSpec((tm, tk_eff), lambda i, j, k: (i, k)),   # x (B, K)
        pl.BlockSpec((tk_eff, tn), lambda i, j, k: (k, j)),   # W^T (K, D_out)
        pl.BlockSpec((1, tn), lambda i, j, k: (0, j)),        # bias
    ]
    out_specs = [
        pl.BlockSpec((tm, tn), lambda i, j, k: (i, j)),       # relu(z)
        pl.BlockSpec((tm, tn), lambda i, j, k: (i, j)),       # (z > 0)
    ]
    out_shape = (jax.ShapeDtypeStruct((bp, np_), out_dtype),
                 jax.ShapeDtypeStruct((bp, np_), grad_dtype))

    if nk == 1:
        kernel = _dfa_fc_kernel_single_k
        scratch_shapes = []
    else:
        kernel = _dfa_fc_kernel_multi_k
        scratch_shapes = [pltpu.VMEM((tm, tn), jnp.float32)]

    y, dy = pl.pallas_call(
        kernel,
        out_shape=out_shape,
        grid_spec=pltpu.PrefetchScalarGridSpec(
            num_scalar_prefetch=0,
            grid=grid,
            in_specs=in_specs,
            out_specs=out_specs,
            scratch_shapes=scratch_shapes),
        compiler_params=pltpu.CompilerParams(
            dimension_semantics=("parallel", "parallel", "arbitrary"),
            vmem_limit_bytes=48 * 1024 * 1024),
    )(xq, wT, b2)

    if (bp, np_) != (B, d_out):
        y = y[:B, :d_out]
        dy = dy[:B, :d_out]
    return y, dy


def init_params(key, input_dim, output_dim, global_error_dim):
    """nn.Linear default init U(-1/sqrt(in), 1/sqrt(in)) plus the DFA feedback
    matrix randn(out, gerr)/sqrt(gerr) (feedback is only used in backward)."""
    kw, kb, kf = jax.random.split(key, 3)
    bound = 1.0 / math.sqrt(input_dim)
    weight = jax.random.uniform(kw, (output_dim, input_dim), jnp.float32,
                                minval=-bound, maxval=bound)
    bias = jax.random.uniform(kb, (output_dim,), jnp.float32,
                              minval=-bound, maxval=bound)
    feedback = jax.random.normal(kf, (output_dim, global_error_dim),
                                 jnp.float32) / math.sqrt(global_error_dim)
    return weight, bias, feedback


if __name__ == "__main__":
    key = jax.random.PRNGKey(0)

    def reference(x, weight, bias, compute_dtype):
        # Same bf16-operand / f32-accumulate contract as the kernel.
        z = jnp.dot(x.astype(compute_dtype), weight.T.astype(compute_dtype),
                    preferred_element_type=jnp.float32) + bias
        return z, jnp.maximum(z, 0.0), (z > 0.0).astype(jnp.float32)

    # --- case 1: module-consistent small shapes (single-K fast path) ------
    B, input_dim, output_dim, global_error_dim = 8, 32, 64, 16
    k1, k2 = jax.random.split(key)
    x = jax.random.normal(k1, (B, input_dim), jnp.float32)
    weight, bias, feedback = init_params(k2, input_dim, output_dim,
                                         global_error_dim)

    y, dy = dfa_fully_connected_forward(x, weight, bias)
    jax.block_until_ready((y, dy))

    z_ref, y_ref, dy_ref = reference(x, weight, bias, jnp.bfloat16)
    assert y.shape == (B, output_dim) and dy.shape == (B, output_dim)
    assert jnp.allclose(y.astype(jnp.float32), y_ref, atol=1e-3, rtol=1e-3)
    mism = dy.astype(jnp.float32) != dy_ref
    # Mask may only differ where z is within rounding distance of 0.
    assert jnp.all(~mism | (jnp.abs(z_ref) < 1e-2))

    # --- case 2: force the K-tiled accumulator path (d_in > tk) -----------
    B2, d_in2, d_out2 = 16, 256, 128
    k3, k4 = jax.random.split(k2)
    x2 = jax.random.normal(k3, (B2, d_in2), jnp.float32)
    w2, b2, _ = init_params(k4, d_in2, d_out2, global_error_dim)

    y2, dy2 = dfa_fully_connected_forward(x2, w2, b2, tk=128)
    jax.block_until_ready((y2, dy2))

    z2_ref, y2_ref, dy2_ref = reference(x2, w2, b2, jnp.bfloat16)
    assert jnp.allclose(y2.astype(jnp.float32), y2_ref, atol=1e-3, rtol=1e-3)
    mism2 = dy2.astype(jnp.float32) != dy2_ref
    assert jnp.all(~mism2 | (jnp.abs(z2_ref) < 1e-2))

    # TODO(synk): backward() (DFA feedback contraction + dW/db) is a separate
    # kernel and is not part of this forward-pass translation.
    print("KERNEL_OK")
</pallas_src>

<mosaic_0001>
module attributes {stable_mosaic.version = 11 : i64} {
  func.func @_dfa_fc_kernel_single_k(%arg0: i32, %arg1: i32, %arg2: i32, %arg3: memref<16x32xbf16, #tpu.memory_space<vmem>>, %arg4: memref<32x128xbf16, #tpu.memory_space<vmem>>, %arg5: memref<1x128xf32, #tpu.memory_space<vmem>>, %arg6: memref<16x128xf32, #tpu.memory_space<vmem>>, %arg7: memref<16x128xbf16, #tpu.memory_space<vmem>>) attributes {dimension_semantics = [#tpu.dimension_semantics<parallel>, #tpu.dimension_semantics<parallel>, #tpu.dimension_semantics<arbitrary>], iteration_bounds = array<i64: 1, 1, 1>, scalar_prefetch = 0 : i64, scratch_operands = 0 : i64, tpu.core_type = #tpu.core_type<tc>, window_params = [{transform_indices = @transform_0, window_bounds = array<i64: 16, 32>}, {transform_indices = @transform_1, window_bounds = array<i64: 32, 128>}, {transform_indices = @transform_2, window_bounds = array<i64: 1, 128>}, {transform_indices = @transform_3, window_bounds = array<i64: 16, 128>}, {transform_indices = @transform_4, window_bounds = array<i64: 16, 128>}]} {
    %c0 = arith.constant 0 : index
    %c0_0 = arith.constant 0 : index
    %0 = vector.load %arg3[%c0, %c0_0] : memref<16x32xbf16, #tpu.memory_space<vmem>>, vector<16x32xbf16>
    %c0_1 = arith.constant 0 : index
    %c0_2 = arith.constant 0 : index
    %1 = vector.load %arg4[%c0_1, %c0_2] : memref<32x128xbf16, #tpu.memory_space<vmem>>, vector<32x128xbf16>
    %cst = arith.constant dense<0.000000e+00> : vector<16x128xf32>
    %2 = tpu.matmul %0, %1, %cst {dimension_numbers = #tpu.dot_dimension_numbers<[1], [0], [0], [1], [0, 0, 1, 1], [], []>} : vector<16x32xbf16>, vector<32x128xbf16>, vector<16x128xf32> -> vector<16x128xf32>
    %c0_3 = arith.constant 0 : index
    %c0_4 = arith.constant 0 : index
    %3 = vector.load %arg5[%c0_3, %c0_4] : memref<1x128xf32, #tpu.memory_space<vmem>>, vector<1x128xf32>
    %4 = vector.broadcast %3 : vector<1x128xf32> to vector<16x128xf32>
    %5 = arith.addf %2, %4 : vector<16x128xf32>
    %cst_5 = arith.constant 0.000000e+00 : f32
    %6 = vector.broadcast %cst_5 : f32 to vector<16x128xf32>
    %7 = arith.maximumf %5, %6 : vector<16x128xf32>
    %c0_6 = arith.constant 0 : index
    %c0_7 = arith.constant 0 : index
    %8 = vector.load %arg6[%c0_6, %c0_7] : memref<16x128xf32, #tpu.memory_space<vmem>>, vector<16x128xf32>
    tpu.vector_store %arg6[%c0_6, %c0_7], %7 {strides = array<i32>} : memref<16x128xf32, #tpu.memory_space<vmem>>, vector<16x128xf32>,
    %cst_8 = arith.constant 0.000000e+00 : f32
    %9 = vector.broadcast %cst_8 : f32 to vector<16x128xf32>
    %10 = arith.cmpf ogt, %5, %9 : vector<16x128xf32>
    %11 = arith.extui %10 : vector<16x128xi1> to vector<16x128xi32>
    %12 = arith.sitofp %11 : vector<16x128xi32> to vector<16x128xf32>
    %13 = arith.truncf %12 : vector<16x128xf32> to vector<16x128xbf16>
    %c0_9 = arith.constant 0 : index
    %c0_10 = arith.constant 0 : index
    %14 = vector.load %arg7[%c0_9, %c0_10] : memref<16x128xbf16, #tpu.memory_space<vmem>>, vector<16x128xbf16>
    tpu.vector_store %arg7[%c0_9, %c0_10], %13 {strides = array<i32>} : memref<16x128xbf16, #tpu.memory_space<vmem>>, vector<16x128xbf16>,
    return
  }
  func.func @transform_0(%arg0: i32, %arg1: i32, %arg2: i32) -> (i32, i32) {
    %c0_i32 = arith.constant 0 : i32
    return %arg0, %arg2 : i32, i32
  }
  func.func @transform_1(%arg0: i32, %arg1: i32, %arg2: i32) -> (i32, i32) {
    %c0_i32 = arith.constant 0 : i32
    return %arg2, %arg1 : i32, i32
  }
  func.func @transform_2(%arg0: i32, %arg1: i32, %arg2: i32) -> (i32, i32) {
    %c0_i32 = arith.constant 0 : i32
    %c0_i32_0 = arith.constant 0 : i32
    return %c0_i32, %arg1 : i32, i32
  }
  func.func @transform_3(%arg0: i32, %arg1: i32, %arg2: i32) -> (i32, i32) {
    %c0_i32 = arith.constant 0 : i32
    return %arg0, %arg1 : i32, i32
  }
  func.func @transform_4(%arg0: i32, %arg1: i32, %arg2: i32) -> (i32, i32) {
    %c0_i32 = arith.constant 0 : i32
    return %arg0, %arg1 : i32, i32
  }
}

</mosaic_0001>

<llo_original>
// kernel: tpu_custom_call.1
$region0: #{tpu_custom_call.1}
  #allocation0 [shape = 'u32[]', space=smem, size = 0x4, offset = 0x4, fixed_abs, tag = 'smem constant byte address 0x4 - core index']
  #allocation1 [shape = 'u32[144,128]{1,0:T(1,128)}', space=vmem, size = 0x12000, scoped, tag = 'internal scratch']
  %s0 = inlined_call_operand.hbm [shape: bf16[16,32], index: 0, kind: input, shape index: {}]
  %s1 = inlined_call_operand.hbm [shape: bf16[32,128], index: 1, kind: input, shape index: {}]
  %s2 = inlined_call_operand.vmem [shape: f32[1,128], index: 2, kind: input, shape index: {}]
  %s3 = inlined_call_operand.hbm [shape: f32[16,128], index: 3, kind: output, shape index: {0}]
  %s4 = inlined_call_operand.hbm [shape: bf16[16,128], index: 4, kind: output, shape index: {1}]
  %5 = xla_tuple %s3, %s4
  %s6 = sld [smem:[#allocation0]]
  $region38: #{tpu_custom_call.1} parent=0
    _
  %s8 = ssub.s32 1, %s6
  %s9 = scalar_select 0, %s8, %s6
  $region1: #{tpu_custom_call.1} parent=0
    #allocation2 [shape = 'u8[4096]{0}', space=vmem, size = 0x1000, scoped, tag = 'input window, operand 0, single buffered']
    #allocation3 [shape = 's32[1]{0}', space=sflag, size = 0x4, scoped, tag = 'scoped memory for tpu_custom_call.1']
    #allocation4 [shape = 's32[1]{0}', space=sflag, size = 0x4, scoped, tag = 'scoped memory for tpu_custom_call.1']
    #allocation5 [shape = 'u8[8192]{0}', space=vmem, size = 0x2000, scoped, tag = 'input window, operand 1, single buffered']
    #allocation6 [shape = 's32[1]{0}', space=sflag, size = 0x4, scoped, tag = 'scoped memory for tpu_custom_call.1']
    #allocation7 [shape = 'u8[8192]{0}', space=vmem, size = 0x2000, scoped, tag = 'output window, operand 0, single buffered']
    #allocation8 [shape = 'u8[4096]{0}', space=vmem, size = 0x1000, scoped, tag = 'output window, operand 1, single buffered']
    #allocation9 [shape = 's32[1]{0}', space=sflag, size = 0x4, scoped, tag = 'scoped memory for tpu_custom_call.1']
    %10 = vsyncpa [#allocation3], 0
    %11 = vsyncpa [#allocation6], 0
    %12 = vsyncpa [#allocation4], 0
    %13 = vsyncpa [#allocation9], 0
    // Predicated region
    $region2: #{tpu_custom_call.1} parent=1 // pred_check
      _
    $region3: #{tpu_custom_call.1} parent=1 // pred_check_branch
      %15 = sbr.rel (0) target = $region5
    $region4: #{tpu_custom_call.1} parent=1 // pred_region
      %s17 = ssub.s32 128, 128
      %18 = vsyncadd [#allocation3], %s17
      %s19 = sshll.u32 [#allocation2], 4
      %s20 = int_to_ptr.vmem [resolvable:$true] %s19
      %25 = dma.hbm_to_vmem [thread:$0]  %s0, 128, %s20, [#allocation3], 64, 64, 4
    $region5: #{tpu_custom_call.1} parent=1 // pred_fallthru
      _
    // Predicated region
    $region6: #{tpu_custom_call.1} parent=1 // pred_check
      _
    $region7: #{tpu_custom_call.1} parent=1 // pred_check_branch
      %27 = sbr.rel (0) target = $region9
    $region8: #{tpu_custom_call.1} parent=1 // pred_region
      %s29 = ssub.s32 256, 256
      %30 = vsyncadd [#allocation6], %s29
      %s31 = sshll.u32 [#allocation5], 4
      %s32 = int_to_ptr.vmem [resolvable:$true] %s31
      %37 = dma.hbm_to_vmem [thread:$0]  %s1, 256, %s32, [#allocation6], 64, 64, 4
    $region9: #{tpu_custom_call.1} parent=1 // pred_fallthru
      _
    // Predicated region
    $region10: #{tpu_custom_call.1} parent=1 // pred_check
      _
    $region11: #{tpu_custom_call.1} parent=1 // pred_check_branch
      %39 = sbr.rel (0) target = $region13
    $region12: #{tpu_custom_call.1} parent=1 // pred_region
      _
    $region13: #{tpu_custom_call.1} parent=1 // pred_fallthru
      _
    // Predicated region
    $region14: #{tpu_custom_call.1} parent=1 // pred_check
      _
    $region15: #{tpu_custom_call.1} parent=1 // pred_check_branch
      %41 = sbr.rel (0) target = $region17
    $region16: #{tpu_custom_call.1} parent=1 // pred_region
      %42 = dma.done [#allocation3], 128
    $region17: #{tpu_custom_call.1} parent=1 // pred_fallthru
      _
    // Predicated region
    $region18: #{tpu_custom_call.1} parent=1 // pred_check
      _
    $region19: #{tpu_custom_call.1} parent=1 // pred_check_branch
      %44 = sbr.rel (0) target = $region21
    $region20: #{tpu_custom_call.1} parent=1 // pred_region
      %45 = dma.done [#allocation6], 256
    $region21: #{tpu_custom_call.1} parent=1 // pred_fallthru
      _
    %v47 = vld [vmem:[#allocation2] sm:$0xf]
    %v48 = vld [vmem:[#allocation2 + $0x4] sm:$0xf]
    %v49 = vld [vmem:[#allocation5] sm:$0xf]
    %v50 = vld [vmem:[#allocation5 + $0x4] sm:$0xf]
    %v51 = vld [vmem:[#allocation5 + $0x8] sm:$0xf]
    %v52 = vld [vmem:[#allocation5 + $0xc] sm:$0xf]
    %v53 = vld [vmem:[%s2] sm:$0x1]
    %v55 = vlaneseq
    %v56 = vshrl.u32 %v55, 7
    %v57 = vsub.s32 0, %v56
    %v58 = vrot.slane %v53, %v57
    %v62 = vunpack.c.l.b16 %v47
    %v63 = vunpack.c.l.b16 %v48
    %v64 = vpack.c.b16 %v63, %v62
    %v69 = vunpack.c.l.b16 %v49
    %v70 = vunpack.c.l.b16 %v50
    %v71 = vunpack.c.l.b16 %v51
    %v72 = vunpack.c.l.b16 %v52
    %v73 = vpack.c.b16 %v70, %v69
    %v74 = vpack.c.b16 %v72, %v71
    %vm77 = vcmask 261120
    %v79 = vsel %vm77, %v64, 0
    %81 = vmatprep.subr.bf16.mxu0 0
    %82 = vmatpush1.bf16.msra.mxu0 0
    %83 = vmatprep.subr.bf16.mxu0 0
    %84 = vmatpush1.bf16.msra.mxu0 0
    %85 = vmatprep.subr.bf16.mxu0 0
    %86 = vmatpush1.bf16.msra.mxu0 0
    %87 = vmatprep.subr.bf16.mxu0 0
    %88 = vmatpush1.bf16.msra.mxu0 0
    %89 = vmatprep.subr.bf16.mxu0 0
    %90 = vmatpush1.bf16.msra.mxu0 0
    %91 = vmatprep.subr.bf16.mxu0 0
    %92 = vmatpush1.bf16.msra.mxu0 0
    %93 = vmatprep.subr.bf16.mxu0 0
    %94 = vmatpush1.bf16.msra.mxu0 %v74
    %95 = vmatprep.subr.bf16.mxu0 0
    %96 = vmatpush1.bf16.msra.mxu0 %v73
    %97 = vmatprep.subr.bf16.mxu0 0
    %98 = vmatpush2.bf16.msra.mxu0 0
    %99 = vmatprep.subr.bf16.mxu0 0
    %100 = vmatpush2.bf16.msra.mxu0 0
    %101 = vmatprep.subr.bf16.mxu0 0
    %102 = vmatpush2.bf16.msra.mxu0 0
    %103 = vmatprep.subr.bf16.mxu0 0
    %104 = vmatpush2.bf16.msra.mxu0 0
    %105 = vmatprep.subr.bf16.mxu0 0
    %106 = vmatpush2.bf16.msra.mxu0 0
    %107 = vmatprep.subr.bf16.mxu0 0
    %108 = vmatpush2.bf16.msra.mxu0 0
    %109 = vmatprep.subr.bf16.mxu0 0
    %110 = vmatpush2.bf16.msra.mxu0 0
    %111 = vmatprep.subr.bf16.mxu0 0
    %112 = vmatpush2.bf16.msra.mxu0 0
    %113 = vmatprep.mubr.bf16.mxu0 0
    %114 = vmatmul.mubr.bf16.gmra.mxu0 %v79
    %v115 = vpop.f32.mrf.mxu0
    %v116 = vadd.f32 %v58, %v115
    %v117 = vpop.f32.mrf.mxu0
    %v118 = vpop.f32.mrf.mxu0
    %v119 = vadd.f32 %v58, %v118
    %v120 = vpop.f32.mrf.mxu0
    %121 = vdwg.mxu0
    %v122 = vmax.f32 %v116, 0.0
    %v123 = vmax.f32 %v119, 0.0
    %124 = vst [vmem:[#allocation7] sm:$0xff] %v122
    %125 = vst [vmem:[#allocation7 + $0x8] sm:$0xff] %v123
    %vm126 = vcmp.gt.f32.partialorder %v116, 0.0
    %vm127 = vcmp.gt.f32.partialorder %v119, 0.0
    %v128 = vsel %vm126, 1, 0
    %v129 = vsel %vm127, 1, 0
    %v130 = vcvt.s32.f32 %v128
    %v131 = vcvt.s32.f32 %v129
    %v132 = vpack.c.bf16 %v131, %v130
    %v134 = vunpack.c.l.b16 %v132
    %v135 = vunpack.c.h.b16 %v132
    %v136 = vpack.c.b16 %v134, %v134
    %v137 = vpack.c.b16 %v135, %v135
    %140 = vst [vmem:[#allocation8] sm:$0xf] %v136
    %141 = vst [vmem:[#allocation8 + $0x4] sm:$0xf] %v137
    // Predicated region
    $region22: #{tpu_custom_call.1} parent=1 // pred_check
      _
    $region23: #{tpu_custom_call.1} parent=1 // pred_check_branch
      %143 = sbr.rel (0) target = $region25
    $region24: #{tpu_custom_call.1} parent=1 // pred_region
      %s145 = ssub.s32 256, 256
      %146 = vsyncadd [#allocation4], %s145
      %s147 = sshll.u32 [#allocation7], 4
      %s148 = int_to_ptr.vmem [resolvable:$true] %s147
      %153 = dma.vmem_to_hbm [thread:$0]  %s148, 256, %s3, [#allocation4], 128, 128, 8
    $region25: #{tpu_custom_call.1} parent=1 // pred_fallthru
      _
    // Predicated region
    $region26: #{tpu_custom_call.1} parent=1 // pred_check
      _
    $region27: #{tpu_custom_call.1} parent=1 // pred_check_branch
      %155 = sbr.rel (0) target = $region29
    $region28: #{tpu_custom_call.1} parent=1 // pred_region
      %s157 = ssub.s32 128, 128
      %158 = vsyncadd [#allocation9], %s157
      %s159 = sshll.u32 [#allocation8], 4
      %s160 = int_to_ptr.vmem [resolvable:$true] %s159
      %165 = dma.vmem_to_hbm [thread:$0]  %s160, 128, %s4, [#allocation9], 64, 64, 4
    $region29: #{tpu_custom_call.1} parent=1 // pred_fallthru
      _
    // Predicated region
    $region30: #{tpu_custom_call.1} parent=1 // pred_check
      _
    $region31: #{tpu_custom_call.1} parent=1 // pred_check_branch
      %167 = sbr.rel (0) target = $region33
    $region32: #{tpu_custom_call.1} parent=1 // pred_region
      %168 = dma.done [#allocation4], 256
    $region33: #{tpu_custom_call.1} parent=1 // pred_fallthru
      _
    // Predicated region
    $region34: #{tpu_custom_call.1} parent=1 // pred_check
      _
    $region35: #{tpu_custom_call.1} parent=1 // pred_check_branch
      %170 = sbr.rel (0) target = $region37
    $region36: #{tpu_custom_call.1} parent=1 // pred_region
      %171 = dma.done [#allocation9], 128
    $region37: #{tpu_custom_call.1} parent=1 // pred_fallthru
      _
    %172 = vsyncpa [#allocation3], 1
    %173 = vsyncpa [#allocation6], 1
    %174 = vsyncpa [#allocation4], 1
    %175 = vsyncpa [#allocation9], 1

</llo_original>
